<compile_context>
chip_gen: v5e
topology: v5e:2x2
jax: 0.10.0
libtpu: 0.0.40
codegen_flags: <defaults>
</compile_context>

<pallas_src>
import functools

import jax
import jax.numpy as jnp
import numpy as np
from jax.experimental import pallas as pl
from jax.experimental.pallas import tpu as pltpu

# ------------------------- problem sizes (small) -------------------------
B = 2      # batch
T = 8      # tokens
S = 8      # spans (== parents dimension)
D = 32     # token/span vector dim
DL = 16    # label embedding dim
H = 32     # hidden dim of the tagger MLP
C = 3      # BIO classes
NUM_LABELS = 5
NO_LABEL = True   # SpanFinder(no_label=True): label features are all-zero


# ------------------------------ Pallas kernel ------------------------------
def _span_finder_kernel(feat_ref, bio_ref, mask_ref,
                        w1_ref, b1_ref, w2_ref, b2_ref,
                        nll_ref, pos_ref):
    # Shapes (R = B*S*T = 128, DF = D + F where F = D or D+DL):
    #   feat_ref [DF, R]  fused per-pair [token ; parent(+label)] features
    #   bio_ref  [1, R]   int32 BIO class index per pair
    #   mask_ref [1, R]   f32 combined parent*token mask
    #   w1_ref   [H, DF]  fused [Wt ; Ws (; Wl)]^T
    #   b1_ref   [H, 1]
    #   w2_ref   [C, H], b2_ref [C, 1]
    # Outputs:
    #   nll_ref  [1, R]   masked NLL terms
    #   pos_ref  [1, R]   masked "tagged non-O" indicator
    h = jnp.tanh(jnp.dot(w1_ref[...], feat_ref[...],
                         preferred_element_type=jnp.float32)
                 + b1_ref[...])                                     # [H, R]

    # Class axis on sublanes: [C, R] logits, pair axis stays lane-dense.
    logits = jnp.dot(w2_ref[...], h,
                     preferred_element_type=jnp.float32) + b2_ref[...]   # [C, R]
    l0 = logits[0:1, :]   # B
    l1 = logits[1:2, :]   # I
    l2 = logits[2:3, :]   # O

    # log-softmax over the 3 classes as explicit VPU/EUP ops on dense slabs.
    m = jnp.maximum(jnp.maximum(l0, l1), l2)
    e0 = jnp.exp(l0 - m)
    e1 = jnp.exp(l1 - m)
    e2 = jnp.exp(l2 - m)
    lse = m + jnp.log(e0 + e1 + e2)                                # [1, R]

    # NLL against the gold class index (select, no one-hot / XLU reduce).
    cls = bio_ref[...]                                             # [1, R] int32
    sel = jnp.where(cls == 0, l0, jnp.where(cls == 1, l1, l2))     # [1, R]
    mask = mask_ref[...]                                           # [1, R]
    nll_ref[...] = (lse - sel) * mask

    # Prediction indicator: argmax != O, argmax tie-break toward lower class
    # index -> max(l0, l1) >= l2.
    not_o = (jnp.maximum(l0, l1) >= l2).astype(jnp.float32)
    pos_ref[...] = not_o * mask


def _tagger_pallas(feat_t, bio_cls, mask_flat, W1T, b1T, W2T, b2T):
    df, r = feat_t.shape
    h = W1T.shape[0]
    c = W2T.shape[0]

    grid_spec = pltpu.PrefetchScalarGridSpec(
        num_scalar_prefetch=0,
        grid=(1,),   # single step: whole (tiny) problem fits VMEM at once
        in_specs=[
            pl.BlockSpec((df, r), lambda i: (0, 0)),  # fused features [DF, R]
            pl.BlockSpec((1, r), lambda i: (0, 0)),   # bio class idx  [1, R]
            pl.BlockSpec((1, r), lambda i: (0, 0)),   # combined mask  [1, R]
            pl.BlockSpec((h, df), lambda i: (0, 0)),  # [Wt;Ws(;Wl)]^T
            pl.BlockSpec((h, 1), lambda i: (0, 0)),   # b1
            pl.BlockSpec((c, h), lambda i: (0, 0)),   # W2^T
            pl.BlockSpec((c, 1), lambda i: (0, 0)),   # b2
        ],
        out_specs=[
            pl.BlockSpec((1, r), lambda i: (0, 0)),   # masked NLL (lane-dense)
            pl.BlockSpec((1, r), lambda i: (0, 0)),   # masked non-O indicator
        ],
    )
    nll_m, pos_m = pl.pallas_call(
        _span_finder_kernel,
        out_shape=(jax.ShapeDtypeStruct((1, r), jnp.float32),
                   jax.ShapeDtypeStruct((1, r), jnp.float32)),
        grid_spec=grid_spec,
        compiler_params=pltpu.CompilerParams(
            dimension_semantics=("arbitrary",)),
    )(feat_t, bio_cls, mask_flat, W1T, b1T, W2T, b2T)
    return nll_m, pos_m


# ------------------------- SpanFinder forward (glue) -------------------------
def span_finder_forward(params, token_vec, token_mask, span_vec, span_mask,
                        span_labels, parent_indices, parent_mask, bio_seqs,
                        no_label=NO_LABEL):
    """Returns {'loss': scalar, 'prediction': [batch, span] bool}."""
    b, s = parent_indices.shape
    t = token_vec.shape[1]
    d = token_vec.shape[2]
    r = b * s * t

    # Gather each span's parent representation / parent label (plain-JAX glue).
    parent_vec = jnp.take_along_axis(span_vec, parent_indices[:, :, None], axis=1)
    if no_label:
        # no_label=True: skip the label path entirely (all-zero features).
        pf = parent_vec                                              # [b, s, d]
        Wsl = params["Ws"]                                           # [d, h]
    else:
        parent_labels = jnp.take_along_axis(span_labels, parent_indices, axis=1)
        label_vec = params["label_emb"][parent_labels]               # [b, s, dl]
        pf = jnp.concatenate([parent_vec, label_vec], axis=-1)       # [b, s, d+dl]
        Wsl = jnp.concatenate([params["Ws"], params["Wl"]], axis=0)  # [d+dl, h]
    f = pf.shape[-1]

    # Layout plumbing (all plain XLA): expand to the flattened (b, s, t) pair
    # axis, fuse token + parent features, transpose so the pair axis is the
    # lane-dense last dim.
    tokE = jnp.broadcast_to(token_vec[:, None, :, :], (b, s, t, d))
    pfE = jnp.broadcast_to(pf[:, :, None, :], (b, s, t, f))
    feat_t = jnp.concatenate([tokE, pfE], axis=-1).reshape(r, d + f).T   # [d+f, r]

    # Fused first-layer weight: one MXU matmul in the kernel.
    W1T = jnp.concatenate([params["Wt"], Wsl], axis=0).T             # [h, d+f]
    b1T = params["b1"].reshape(-1, 1)                                # [h, 1]
    W2T = params["W2"].T                                             # [c, h]
    b2T = params["b2"].reshape(-1, 1)                                # [c, 1]

    # One-hot BIO -> int32 class indices (3x fewer bytes into the kernel).
    bio_cls = jnp.argmax(bio_seqs, axis=-1).astype(jnp.int32).reshape(1, r)

    # Combined parent*token mask (also needed for the loss denominator).
    mask = (parent_mask.astype(jnp.float32)[:, :, None]
            * token_mask.astype(jnp.float32)[:, None, :])            # [b, s, t]
    mask_flat = mask.reshape(1, r)

    nll_m, pos_m = _tagger_pallas(feat_t, bio_cls, mask_flat,
                                  W1T, b1T, W2T, b2T)

    loss = jnp.sum(nll_m) / jnp.maximum(jnp.sum(mask), 1.0)
    prediction = pos_m.reshape(b, s, t).max(axis=-1) > 0.0
    return {"loss": loss, "prediction": prediction}


# ----------------------------- pure-JAX reference -----------------------------
def span_finder_reference(params, token_vec, token_mask, span_vec, span_mask,
                          span_labels, parent_indices, parent_mask, bio_seqs,
                          no_label=NO_LABEL):
    b, s = parent_indices.shape
    parent_vec = jnp.take_along_axis(span_vec, parent_indices[:, :, None], axis=1)
    if no_label:
        label_vec = jnp.zeros((b, s, DL), jnp.float32)
    else:
        parent_labels = jnp.take_along_axis(span_labels, parent_indices, axis=1)
        label_vec = params["label_emb"][parent_labels]
    tk = jnp.einsum("btd,dh->bth", token_vec, params["Wt"])
    sp = jnp.einsum("bsd,dh->bsh", parent_vec, params["Ws"])
    lb = jnp.einsum("bsl,lh->bsh", label_vec, params["Wl"])
    h = jnp.tanh(sp[:, :, None, :] + lb[:, :, None, :] + tk[:, None, :, :]
                 + params["b1"][0])
    logits = jnp.einsum("bsth,hc->bstc", h, params["W2"]) + params["b2"][0]
    logp = jax.nn.log_softmax(logits, axis=-1)
    nll = -jnp.sum(bio_seqs.astype(jnp.float32) * logp, axis=-1)
    mask = (parent_mask.astype(jnp.float32)[:, :, None]
            * token_mask.astype(jnp.float32)[:, None, :])
    loss = jnp.sum(nll * mask) / jnp.maximum(jnp.sum(mask), 1.0)
    not_o = jnp.maximum(logits[..., 0], logits[..., 1]) >= logits[..., 2]
    prediction = jnp.any(not_o & (mask > 0), axis=-1)
    return {"loss": loss, "prediction": prediction}


# ------------------------------------ main ------------------------------------
if __name__ == "__main__":
    key = jax.random.PRNGKey(0)
    keys = jax.random.split(key, 12)

    # Deterministic synthetic parameters (module __init__ only stores no_label;
    # the tagger parameters below realize the abstract forward).
    scale = 0.1
    params = {
        "Wt": scale * jax.random.normal(keys[0], (D, H), jnp.float32),
        "Ws": scale * jax.random.normal(keys[1], (D, H), jnp.float32),
        "Wl": scale * jax.random.normal(keys[2], (DL, H), jnp.float32),
        "b1": scale * jax.random.normal(keys[3], (1, H), jnp.float32),
        "W2": scale * jax.random.normal(keys[4], (H, C), jnp.float32),
        "b2": scale * jax.random.normal(keys[5], (1, C), jnp.float32),
        "label_emb": scale * jax.random.normal(keys[6], (NUM_LABELS, DL),
                                               jnp.float32),
    }

    # Deterministic example inputs.
    token_vec = jax.random.normal(keys[7], (B, T, D), jnp.float32)
    span_vec = jax.random.normal(keys[8], (B, S, D), jnp.float32)
    token_mask = jnp.stack([jnp.ones((T,), bool),
                            jnp.arange(T) < 6])                      # [B, T]
    span_mask = jnp.stack([jnp.ones((S,), bool),
                           jnp.arange(S) < 5])                       # [B, S]
    span_labels = jax.random.randint(keys[9], (B, S), 0, NUM_LABELS)
    parent_indices = jax.random.randint(keys[10], (B, S), 0, S)
    parent_mask = jax.random.bernoulli(keys[11], 0.6, (B, S)) & span_mask
    gold_cls = jax.random.randint(jax.random.PRNGKey(42), (B, S, T), 0, C)
    bio_seqs = jax.nn.one_hot(gold_cls, C, dtype=jnp.float32)        # [B, S, T, 3]

    fwd = jax.jit(functools.partial(span_finder_forward, params))
    out = fwd(token_vec, token_mask, span_vec, span_mask, span_labels,
              parent_indices, parent_mask, bio_seqs)
    jax.block_until_ready(out)

    ref = span_finder_reference(params, token_vec, token_mask, span_vec,
                                span_mask, span_labels, parent_indices,
                                parent_mask, bio_seqs)
    np.testing.assert_allclose(np.asarray(out["loss"]), np.asarray(ref["loss"]),
                               rtol=2e-2, atol=2e-2)
    np.testing.assert_array_equal(np.asarray(out["prediction"]),
                                  np.asarray(ref["prediction"]))
    assert out["prediction"].shape == (B, S)
    # TODO(synk): inference_forward_handler / get_metrics are abstract,
    # stateful host-side utilities with no Pallas equivalent; not implemented.
    print("KERNEL_OK")
</pallas_src>

<mosaic_0001>
module attributes {stable_mosaic.version = 11 : i64} {
  func.func @_span_finder_kernel(%arg0: i32, %arg1: memref<64x128xf32, #tpu.memory_space<vmem>>, %arg2: memref<1x128xi32, #tpu.memory_space<vmem>>, %arg3: memref<1x128xf32, #tpu.memory_space<vmem>>, %arg4: memref<32x64xf32, #tpu.memory_space<vmem>>, %arg5: memref<32x1xf32, #tpu.memory_space<vmem>>, %arg6: memref<3x32xf32, #tpu.memory_space<vmem>>, %arg7: memref<3x1xf32, #tpu.memory_space<vmem>>, %arg8: memref<1x128xf32, #tpu.memory_space<vmem>>, %arg9: memref<1x128xf32, #tpu.memory_space<vmem>>) attributes {dimension_semantics = [#tpu.dimension_semantics<arbitrary>], iteration_bounds = array<i64: 1>, scalar_prefetch = 0 : i64, scratch_operands = 0 : i64, tpu.core_type = #tpu.core_type<tc>, window_params = [{pipeline_mode = #tpu.pipeline_mode<synchronous>, transform_indices = @transform_0, window_bounds = array<i64: 64, 128>}, {pipeline_mode = #tpu.pipeline_mode<synchronous>, transform_indices = @transform_1, window_bounds = array<i64: 1, 128>}, {pipeline_mode = #tpu.pipeline_mode<synchronous>, transform_indices = @transform_2, window_bounds = array<i64: 1, 128>}, {pipeline_mode = #tpu.pipeline_mode<synchronous>, transform_indices = @transform_3, window_bounds = array<i64: 32, 64>}, {pipeline_mode = #tpu.pipeline_mode<synchronous>, transform_indices = @transform_4, window_bounds = array<i64: 32, 1>}, {pipeline_mode = #tpu.pipeline_mode<synchronous>, transform_indices = @transform_5, window_bounds = array<i64: 3, 32>}, {pipeline_mode = #tpu.pipeline_mode<synchronous>, transform_indices = @transform_6, window_bounds = array<i64: 3, 1>}, {pipeline_mode = #tpu.pipeline_mode<synchronous>, transform_indices = @transform_7, window_bounds = array<i64: 1, 128>}, {pipeline_mode = #tpu.pipeline_mode<synchronous>, transform_indices = @transform_8, window_bounds = array<i64: 1, 128>}]} {
    %c0 = arith.constant 0 : index
    %c0_0 = arith.constant 0 : index
    %0 = vector.load %arg4[%c0, %c0_0] : memref<32x64xf32, #tpu.memory_space<vmem>>, vector<32x64xf32>
    %c0_1 = arith.constant 0 : index
    %c0_2 = arith.constant 0 : index
    %1 = vector.load %arg1[%c0_1, %c0_2] : memref<64x128xf32, #tpu.memory_space<vmem>>, vector<64x128xf32>
    %cst = arith.constant dense<0.000000e+00> : vector<32x128xf32>
    %2 = tpu.matmul %0, %1, %cst {dimension_numbers = #tpu.dot_dimension_numbers<[1], [0], [0], [1], [0, 0, 1, 1], [], []>} : vector<32x64xf32>, vector<64x128xf32>, vector<32x128xf32> -> vector<32x128xf32>
    %c0_3 = arith.constant 0 : index
    %c0_4 = arith.constant 0 : index
    %3 = vector.load %arg5[%c0_3, %c0_4] : memref<32x1xf32, #tpu.memory_space<vmem>>, vector<32x1xf32>
    %4 = vector.broadcast %3 : vector<32x1xf32> to vector<32x128xf32>
    %5 = arith.addf %2, %4 : vector<32x128xf32>
    %6 = math.tanh %5 : vector<32x128xf32>
    %c0_5 = arith.constant 0 : index
    %c0_6 = arith.constant 0 : index
    %7 = vector.load %arg6[%c0_5, %c0_6] : memref<3x32xf32, #tpu.memory_space<vmem>>, vector<3x32xf32>
    %cst_7 = arith.constant dense<0.000000e+00> : vector<3x128xf32>
    %8 = tpu.matmul %7, %6, %cst_7 {dimension_numbers = #tpu.dot_dimension_numbers<[1], [0], [0], [1], [0, 0, 1, 1], [], []>} : vector<3x32xf32>, vector<32x128xf32>, vector<3x128xf32> -> vector<3x128xf32>
    %c0_8 = arith.constant 0 : index
    %c0_9 = arith.constant 0 : index
    %9 = vector.load %arg7[%c0_8, %c0_9] : memref<3x1xf32, #tpu.memory_space<vmem>>, vector<3x1xf32>
    %10 = vector.broadcast %9 : vector<3x1xf32> to vector<3x128xf32>
    %11 = arith.addf %8, %10 : vector<3x128xf32>
    %12 = vector.extract_strided_slice %11 {offsets = [0, 0], sizes = [1, 128], strides = [1, 1]} : vector<3x128xf32> to vector<1x128xf32>
    %13 = vector.extract_strided_slice %11 {offsets = [1, 0], sizes = [1, 128], strides = [1, 1]} : vector<3x128xf32> to vector<1x128xf32>
    %14 = vector.extract_strided_slice %11 {offsets = [2, 0], sizes = [1, 128], strides = [1, 1]} : vector<3x128xf32> to vector<1x128xf32>
    %15 = arith.maximumf %12, %13 : vector<1x128xf32>
    %16 = arith.maximumf %15, %14 : vector<1x128xf32>
    %17 = arith.subf %12, %16 : vector<1x128xf32>
    %18 = math.exp %17 : vector<1x128xf32>
    %19 = arith.subf %13, %16 : vector<1x128xf32>
    %20 = math.exp %19 : vector<1x128xf32>
    %21 = arith.subf %14, %16 : vector<1x128xf32>
    %22 = math.exp %21 : vector<1x128xf32>
    %23 = arith.addf %18, %20 : vector<1x128xf32>
    %24 = arith.addf %23, %22 : vector<1x128xf32>
    %25 = math.log %24 : vector<1x128xf32>
    %26 = arith.addf %16, %25 : vector<1x128xf32>
    %c0_10 = arith.constant 0 : index
    %c0_11 = arith.constant 0 : index
    %27 = vector.load %arg2[%c0_10, %c0_11] : memref<1x128xi32, #tpu.memory_space<vmem>>, vector<1x128xi32>
    %c0_i32 = arith.constant 0 : i32
    %28 = vector.broadcast %c0_i32 : i32 to vector<1x128xi32>
    %29 = arith.cmpi eq, %27, %28 : vector<1x128xi32>
    %c1_i32 = arith.constant 1 : i32
    %30 = vector.broadcast %c1_i32 : i32 to vector<1x128xi32>
    %31 = arith.cmpi eq, %27, %30 : vector<1x128xi32>
    %32 = arith.select %31, %13, %14 : vector<1x128xi1>, vector<1x128xf32>
    %33 = arith.select %29, %12, %32 : vector<1x128xi1>, vector<1x128xf32>
    %c0_12 = arith.constant 0 : index
    %c0_13 = arith.constant 0 : index
    %34 = vector.load %arg3[%c0_12, %c0_13] : memref<1x128xf32, #tpu.memory_space<vmem>>, vector<1x128xf32>
    %35 = arith.subf %26, %33 : vector<1x128xf32>
    %36 = arith.mulf %35, %34 : vector<1x128xf32>
    %c0_14 = arith.constant 0 : index
    %c0_15 = arith.constant 0 : index
    %37 = vector.load %arg8[%c0_14, %c0_15] : memref<1x128xf32, #tpu.memory_space<vmem>>, vector<1x128xf32>
    tpu.vector_store %arg8[%c0_14, %c0_15], %36 {strides = array<i32>} : memref<1x128xf32, #tpu.memory_space<vmem>>, vector<1x128xf32>,
    %38 = arith.maximumf %12, %13 : vector<1x128xf32>
    %39 = arith.cmpf oge, %38, %14 : vector<1x128xf32>
    %40 = arith.extui %39 : vector<1x128xi1> to vector<1x128xi32>
    %41 = arith.sitofp %40 : vector<1x128xi32> to vector<1x128xf32>
    %42 = arith.mulf %41, %34 : vector<1x128xf32>
    %c0_16 = arith.constant 0 : index
    %c0_17 = arith.constant 0 : index
    %43 = vector.load %arg9[%c0_16, %c0_17] : memref<1x128xf32, #tpu.memory_space<vmem>>, vector<1x128xf32>
    tpu.vector_store %arg9[%c0_16, %c0_17], %42 {strides = array<i32>} : memref<1x128xf32, #tpu.memory_space<vmem>>, vector<1x128xf32>,
    return
  }
  func.func @transform_0(%arg0: i32) -> (i32, i32) {
    %c0_i32 = arith.constant 0 : i32
    %c0_i32_0 = arith.constant 0 : i32
    %c0_i32_1 = arith.constant 0 : i32
    return %c0_i32, %c0_i32_0 : i32, i32
  }
  func.func @transform_1(%arg0: i32) -> (i32, i32) {
    %c0_i32 = arith.constant 0 : i32
    %c0_i32_0 = arith.constant 0 : i32
    %c0_i32_1 = arith.constant 0 : i32
    return %c0_i32, %c0_i32_0 : i32, i32
  }
  func.func @transform_2(%arg0: i32) -> (i32, i32) {
    %c0_i32 = arith.constant 0 : i32
    %c0_i32_0 = arith.constant 0 : i32
    %c0_i32_1 = arith.constant 0 : i32
    return %c0_i32, %c0_i32_0 : i32, i32
  }
  func.func @transform_3(%arg0: i32) -> (i32, i32) {
    %c0_i32 = arith.constant 0 : i32
    %c0_i32_0 = arith.constant 0 : i32
    %c0_i32_1 = arith.constant 0 : i32
    return %c0_i32, %c0_i32_0 : i32, i32
  }
  func.func @transform_4(%arg0: i32) -> (i32, i32) {
    %c0_i32 = arith.constant 0 : i32
    %c0_i32_0 = arith.constant 0 : i32
    %c0_i32_1 = arith.constant 0 : i32
    return %c0_i32, %c0_i32_0 : i32, i32
  }
  func.func @transform_5(%arg0: i32) -> (i32, i32) {
    %c0_i32 = arith.constant 0 : i32
    %c0_i32_0 = arith.constant 0 : i32
    %c0_i32_1 = arith.constant 0 : i32
    return %c0_i32, %c0_i32_0 : i32, i32
  }
  func.func @transform_6(%arg0: i32) -> (i32, i32) {
    %c0_i32 = arith.constant 0 : i32
    %c0_i32_0 = arith.constant 0 : i32
    %c0_i32_1 = arith.constant 0 : i32
    return %c0_i32, %c0_i32_0 : i32, i32
  }
  func.func @transform_7(%arg0: i32) -> (i32, i32) {
    %c0_i32 = arith.constant 0 : i32
    %c0_i32_0 = arith.constant 0 : i32
    %c0_i32_1 = arith.constant 0 : i32
    return %c0_i32, %c0_i32_0 : i32, i32
  }
  func.func @transform_8(%arg0: i32) -> (i32, i32) {
    %c0_i32 = arith.constant 0 : i32
    %c0_i32_0 = arith.constant 0 : i32
    %c0_i32_1 = arith.constant 0 : i32
    return %c0_i32, %c0_i32_0 : i32, i32
  }
}

</mosaic_0001>

<llo_original>
// kernel: span_finder_forward.1
$region0: #{span_finder_forward.1}
  #allocation0 [shape = 'u32[]', space=smem, size = 0x4, offset = 0x4, fixed_abs, tag = 'smem constant byte address 0x4 - core index']
  #allocation1 [shape = 'u32[72,128]{1,0:T(1,128)}', space=vmem, size = 0x9000, scoped, tag = 'internal scratch']
  %s0 = inlined_call_operand.vmem [shape: f32[64,128], index: 0, kind: input, shape index: {}]
  %s1 = inlined_call_operand.vmem [shape: s32[1,128], index: 1, kind: input, shape index: {}]
  %s2 = inlined_call_operand.vmem [shape: f32[1,128], index: 2, kind: input, shape index: {}]
  %s3 = inlined_call_operand.vmem [shape: f32[32,64], index: 3, kind: input, shape index: {}]
  %s4 = inlined_call_operand.vmem [shape: f32[32,1], index: 4, kind: input, shape index: {}]
  %s5 = inlined_call_operand.vmem [shape: f32[3,32], index: 5, kind: input, shape index: {}]
  %s6 = inlined_call_operand.vmem [shape: f32[3,1], index: 6, kind: input, shape index: {}]
  %s7 = inlined_call_operand.vmem [shape: f32[1,128], index: 7, kind: output, shape index: {0}]
  %s8 = inlined_call_operand.vmem [shape: f32[1,128], index: 8, kind: output, shape index: {1}]
  %9 = xla_tuple %s7, %s8
  %s10 = sld [smem:[#allocation0]]
  $region46: #{span_finder_forward.1} parent=0
    _
  %s12 = ssub.s32 1, %s10
  %s13 = scalar_select 0, %s12, %s10
  // Predicated region
  $region2: #{span_finder_forward.1} parent=0 // pred_check
    _
  $region3: #{span_finder_forward.1} parent=0 // pred_check_branch
    %15 = sbr.rel (0) target = $region5
  $region4: #{span_finder_forward.1} parent=0 // pred_region
    _
  $region5: #{span_finder_forward.1} parent=0 // pred_fallthru
    _
  // Predicated region
  $region6: #{span_finder_forward.1} parent=0 // pred_check
    _
  $region7: #{span_finder_forward.1} parent=0 // pred_check_branch
    %17 = sbr.rel (0) target = $region9
  $region8: #{span_finder_forward.1} parent=0 // pred_region
    _
  $region9: #{span_finder_forward.1} parent=0 // pred_fallthru
    _
  // Predicated region
  $region10: #{span_finder_forward.1} parent=0 // pred_check
    _
  $region11: #{span_finder_forward.1} parent=0 // pred_check_branch
    %19 = sbr.rel (0) target = $region13
  $region12: #{span_finder_forward.1} parent=0 // pred_region
    _
  $region13: #{span_finder_forward.1} parent=0 // pred_fallthru
    _
  // Predicated region
  $region14: #{span_finder_forward.1} parent=0 // pred_check
    _
  $region15: #{span_finder_forward.1} parent=0 // pred_check_branch
    %21 = sbr.rel (0) target = $region17
  $region16: #{span_finder_forward.1} parent=0 // pred_region
    _
  $region17: #{span_finder_forward.1} parent=0 // pred_fallthru
    _
  // Predicated region
  $region18: #{span_finder_forward.1} parent=0 // pred_check
    _
  $region19: #{span_finder_forward.1} parent=0 // pred_check_branch
    %23 = sbr.rel (0) target = $region21
  $region20: #{span_finder_forward.1} parent=0 // pred_region
    _
  $region21: #{span_finder_forward.1} parent=0 // pred_fallthru
    _
  // Predicated region
  $region22: #{span_finder_forward.1} parent=0 // pred_check
    _
  $region23: #{span_finder_forward.1} parent=0 // pred_check_branch
    %25 = sbr.rel (0) target = $region25
  $region24: #{span_finder_forward.1} parent=0 // pred_region
    _
  $region25: #{span_finder_forward.1} parent=0 // pred_fallthru
    _
  // Predicated region
  $region26: #{span_finder_forward.1} parent=0 // pred_check
    _
  $region27: #{span_finder_forward.1} parent=0 // pred_check_branch
    %27 = sbr.rel (0) target = $region29
  $region28: #{span_finder_forward.1} parent=0 // pred_region
    _
  $region29: #{span_finder_forward.1} parent=0 // pred_fallthru
    _
  %v28 = vld [vmem:[%s3] sm:$0xff]
  %v29 = vld [vmem:[%s3 + $0x8] sm:$0xff]
  %v30 = vld [vmem:[%s3 + $0x10] sm:$0xff]
  %v31 = vld [vmem:[%s3 + $0x18] sm:$0xff]
  %v32 = vld [vmem:[%s0] sm:$0xff]
  %v33 = vld [vmem:[%s0 + $0x8] sm:$0xff]
  %v34 = vld [vmem:[%s0 + $0x10] sm:$0xff]
  %v35 = vld [vmem:[%s0 + $0x18] sm:$0xff]
  %v36 = vld [vmem:[%s0 + $0x20] sm:$0xff]
  %v37 = vld [vmem:[%s0 + $0x28] sm:$0xff]
  %v38 = vld [vmem:[%s0 + $0x30] sm:$0xff]
  %v39 = vld [vmem:[%s0 + $0x38] sm:$0xff]
  %v40 = vld [vmem:[%s4] sm:$0xff]
  %v41 = vld [vmem:[%s4 + $0x8] sm:$0xff]
  %v42 = vld [vmem:[%s4 + $0x10] sm:$0xff]
  %v43 = vld [vmem:[%s4 + $0x18] sm:$0xff]
  %45 = vset.pattern.permute.xlu0 0
  %46 = vperm.xlu0 %45, %v40
  %v47 = vpop.permute.xlu0 %46
  %50 = vset.pattern.permute.xlu0 0
  %51 = vperm.xlu0 %50, %v41
  %v52 = vpop.permute.xlu0 %51
  %55 = vset.pattern.permute.xlu0 0
  %56 = vperm.xlu0 %55, %v42
  %v57 = vpop.permute.xlu0 %56
  %60 = vset.pattern.permute.xlu0 0
  %61 = vperm.xlu0 %60, %v43
  %v62 = vpop.permute.xlu0 %61
  %vm64 = vcmask 523264
  %v66 = vsel %vm64, %v28, 0
  %v69 = vsel %vm64, %v29, 0
  %v72 = vsel %vm64, %v30, 0
  %v75 = vsel %vm64, %v31, 0
  %77 = vmatpush.msra.mxu0 0.0
  %78 = vmatpush.msra.mxu0 0.0
  %79 = vmatpush.msra.mxu0 0.0
  %80 = vmatpush.msra.mxu0 0.0
  %81 = vmatpush.msra.mxu0 0.0
  %82 = vmatpush.msra.mxu0 0.0
  %83 = vmatpush.msra.mxu0 0.0
  %84 = vmatpush.msra.mxu0 0.0
  %85 = vmatpush.msra.mxu0 %v39
  %86 = vmatpush.msra.mxu0 %v38
  %87 = vmatpush.msra.mxu0 %v37
  %88 = vmatpush.msra.mxu0 %v36
  %89 = vmatpush.msra.mxu0 %v35
  %90 = vmatpush.msra.mxu0 %v34
  %91 = vmatpush.msra.mxu0 %v33
  %92 = vmatpush.msra.mxu0 %v32
  %93 = vmatmul.f32.gmra.mxu0 %v66
  %v94 = vpop.f32.mrf.mxu0
  %v95 = vadd.f32 %v47, %v94
  %96 = vmatmul.f32.gmra.mxu0 %v69
  %v97 = vpop.f32.mrf.mxu0
  %v98 = vadd.f32 %v52, %v97
  %99 = vmatmul.f32.gmra.mxu0 %v72
  %v100 = vpop.f32.mrf.mxu0
  %v101 = vadd.f32 %v57, %v100
  %102 = vmatmul.f32.gmra.mxu0 %v75
  %v103 = vpop.f32.mrf.mxu0
  %v104 = vadd.f32 %v62, %v103
  %105 = vdwg.mxu0
  %v106 = vtanh.pop %v95
  %v107 = vtanh.pop %v98
  %v108 = vtanh.pop %v101
  %v109 = vtanh.pop %v104
  %v110 = vld [vmem:[%s5] sm:$0x7]
  %v111 = vld [vmem:[%s6] sm:$0x7]
  %113 = vset.pattern.permute.xlu0 0
  %114 = vperm.xlu0 %113, %v111
  %v115 = vpop.permute.xlu0 %114
  %vm117 = vcmask 261120
  %v119 = vsel %vm117, %v110, 0
  %121 = vmatpush.msra.mxu0 0.0
  %122 = vmatpush.msra.mxu0 0.0
  %123 = vmatpush.msra.mxu0 0.0
  %124 = vmatpush.msra.mxu0 0.0
  %125 = vmatpush.msra.mxu0 0.0
  %126 = vmatpush.msra.mxu0 0.0
  %127 = vmatpush.msra.mxu0 0.0
  %128 = vmatpush.msra.mxu0 0.0
  %129 = vmatpush.msra.mxu0 0.0
  %130 = vmatpush.msra.mxu0 0.0
  %131 = vmatpush.msra.mxu0 0.0
  %132 = vmatpush.msra.mxu0 0.0
  %133 = vmatpush.msra.mxu0 %v109
  %134 = vmatpush.msra.mxu0 %v108
  %135 = vmatpush.msra.mxu0 %v107
  %136 = vmatpush.msra.mxu0 %v106
  %137 = vmatmul.f32.gmra.mxu0 %v119
  %v138 = vpop.f32.mrf.mxu0
  %v139 = vadd.f32 %v115, %v138
  %140 = vdwg.mxu0
  %v142 = vrot.slane %v139, 1
  %v144 = vmax.f32 %v139, %v142
  %v145 = vrot.slane %v139, 2
  %v147 = vmax.f32 %v144, %v145
  %v148 = vsub.f32 %v139, %v147
  %v149 = vmul.f32 %v148, 1.442695
  %v150 = vpow.pop %v149
  %v152 = vrot.slane %v147, 7
  %v154 = vsub.f32 %v139, %v152
  %v155 = vmul.f32 %v154, 1.442695
  %v156 = vpow.pop %v155
  %v157 = vrot.slane %v147, 6
  %v159 = vsub.f32 %v139, %v157
  %v160 = vmul.f32 %v159, 1.442695
  %v161 = vpow.pop %v160
  %v163 = vrot.slane %v156, 1
  %v165 = vadd.f32 %v150, %v163
  %v167 = vrot.slane %v161, 2
  %v169 = vadd.f32 %v165, %v167
  %v170 = vlog2.pop %v169
  %v171 = vmul.f32 %v170, 0.6931472
  %v172 = vadd.f32 %v147, %v171
  %v173 = vld [vmem:[%s1] sm:$0x1]
  %vm174 = vcmp.eq.s32.totalorder %v173, 0
  %vm175 = vcmp.eq.s32.totalorder %v173, 1
  %176 = vst [vmem:[#allocation1] sm:$0xff] %v139
  %s177 = scalar_lea.vmem [#allocation1], 1
  %v178 = vld [vmem:[%s177] ss:$9 sm:$0xff]
  %180 = vst [vmem:[#allocation1] sm:$0xff] %v139
  %s181 = scalar_lea.vmem [#allocation1], 2
  %v182 = vld [vmem:[%s181] ss:$9 sm:$0xff]
  %v184 = vsel %vm175, %v178, %v182
  %v185 = vsel %vm174, %v139, %v184
  %v186 = vld [vmem:[%s2] sm:$0x1]
  %v187 = vsub.f32 %v172, %v185
  %v188 = vmul.f32 %v187, %v186
  %189 = vst [vmem:[%s7] sm:$0x1] %v188
  %vm190 = vcmp.ge.f32.partialorder %v144, %v145
  %v191 = vsel %vm190, 1, 0
  %v192 = vcvt.s32.f32 %v191
  %v193 = vmul.f32 %v192, %v186
  %194 = vst [vmem:[%s8] sm:$0x1] %v193
  // Predicated region
  $region30: #{span_finder_forward.1} parent=0 // pred_check
    _
  $region31: #{span_finder_forward.1} parent=0 // pred_check_branch
    %196 = sbr.rel (0) target = $region33
  $region32: #{span_finder_forward.1} parent=0 // pred_region
    _
  $region33: #{span_finder_forward.1} parent=0 // pred_fallthru
    _
  // Predicated region
  $region34: #{span_finder_forward.1} parent=0 // pred_check
    _
  $region35: #{span_finder_forward.1} parent=0 // pred_check_branch
    %198 = sbr.rel (0) target = $region37
  $region36: #{span_finder_forward.1} parent=0 // pred_region
    _
  $region37: #{span_finder_forward.1} parent=0 // pred_fallthru
    _
  // Predicated region
  $region38: #{span_finder_forward.1} parent=0 // pred_check
    _
  $region39: #{span_finder_forward.1} parent=0 // pred_check_branch
    %200 = sbr.rel (0) target = $region41
  $region40: #{span_finder_forward.1} parent=0 // pred_region
    _
  $region41: #{span_finder_forward.1} parent=0 // pred_fallthru
    _
  // Predicated region
  $region42: #{span_finder_forward.1} parent=0 // pred_check
    _
  $region43: #{span_finder_forward.1} parent=0 // pred_check_branch
    %202 = sbr.rel (0) target = $region45
  $region44: #{span_finder_forward.1} parent=0 // pred_region
    _
  $region45: #{span_finder_forward.1} parent=0 // pred_fallthru
    _

</llo_original>
